<compile_context>
chip_gen: v6e
topology: v6e:2x2x1
jax: 0.10.0
libtpu: 0.0.40
codegen_flags: <defaults>
</compile_context>

<pallas_src>
import functools

import jax
import jax.numpy as jnp
from jax import lax
from jax.experimental import pallas as pl
from jax.experimental.pallas import tpu as pltpu


# ----------------------------- hardware-aware config --------------------------

def _vmem_capacity_bytes():
    try:
        return int(pltpu.get_tpu_info().vmem_capacity_bytes)
    except Exception:
        return 64 * 1024 * 1024          # conservative (v7x-sized) default


_VMEM_CAP = _vmem_capacity_bytes()
_VMEM_LIMIT = max(32 * 1024 * 1024,
                  min(int(0.75 * _VMEM_CAP), 100 * 1024 * 1024))
# v7x-like: 64 MiB per-TC VMEM (and 2 TensorCores per chip).
_SMALL_VMEM = _VMEM_CAP <= 80 * 1024 * 1024


@functools.lru_cache(maxsize=1)
def _buffered_one_ok():
    """Lazily (at first kernel build, not at import) probe whether
    pipeline_mode=pl.Buffered(1) is accepted; fall back to plain BlockSpecs
    otherwise so the kernels always compile.  The VMEM budgets below are sized
    so that even the double-buffered fallback fits on a 64 MiB-VMEM chip."""
    try:
        def _probe_kernel(x_ref, o_ref):
            o_ref[...] = x_ref[...] + 1.0

        probe = pl.pallas_call(
            _probe_kernel,
            out_shape=jax.ShapeDtypeStruct((8, 128), jnp.float32),
            grid=(2,),
            in_specs=[pl.BlockSpec((8, 128), lambda i: (0, 0),
                                   pipeline_mode=pl.Buffered(1))],
            out_specs=pl.BlockSpec((8, 128), lambda i: (0, 0)),
        )
        out = jax.block_until_ready(probe(jnp.zeros((8, 128), jnp.float32)))
        return bool(jnp.all(out == 1.0))
    except Exception:
        return False


def _invariant_spec(shape, index_map):
    """Single-buffer grid-invariant operands (resident weights) when possible."""
    if _buffered_one_ok():
        return pl.BlockSpec(shape, index_map, pipeline_mode=pl.Buffered(1))
    return pl.BlockSpec(shape, index_map)


def _round_up(x, m):
    return ((x + m - 1) // m) * m


def _pick_tile(dim, targets):
    """Largest target tile that evenly divides dim, else the full dim
    (full-extent blocks always satisfy the (8,128) constraint).  Callers pad
    the dims that could realistically be large AND non-divisible."""
    for t in targets:
        if dim % t == 0:
            return t
    return dim


def _pick_time_block(seq_len, max_block):
    # Candidates are multiples of 8 (sublane) so partial-L blocks stay legal.
    # TODO(synk): sequence lengths not divisible by 8 fall back to a single
    # full-L chunk; pad L upstream for pathological lengths.
    for t in (32, 16, 8):
        if t <= max_block and seq_len % t == 0:
            return t
    return seq_len


def _as(x, dt):
    return x if x.dtype == dt else x.astype(dt)


# ------------------------- generic tiled dense (GEMM + bias) ------------------

def _dense_kernel(x_ref, w_ref, b_ref, o_ref):
    o_ref[...] = (jnp.dot(x_ref[...], w_ref[...],
                          preferred_element_type=jnp.float32)
                  + b_ref[...]).astype(o_ref.dtype)


def dense(x, w_t, bias, *, out_dtype=jnp.bfloat16):
    """x:(M,K) @ w_t:(K,N) + bias:(N,) -> (M,N).  bf16 matmul, f32 accumulate.
    Rows are padded to a multiple of 128 so the row tile never falls back to a
    huge / non-8-divisible full extent."""
    M, K = x.shape
    N = w_t.shape[1]
    Mp = _round_up(M, 128)
    if Mp != M:
        x = jnp.pad(x, ((0, Mp - M), (0, 0)))
    tm = _pick_tile(Mp, (1024, 512, 256, 128))   # bigger tile => fewer W re-streams
    tn = _pick_tile(N, (512, 256, 128))
    bias = _as(bias, jnp.float32).reshape(1, N)

    cost = pl.CostEstimate(flops=int(2 * Mp * N * K), transcendentals=0,
                           bytes_accessed=int(2 * Mp * K + 2 * K * N * (Mp // tm)
                                              + 2 * Mp * N + 4 * N))
    out = pl.pallas_call(
        _dense_kernel,
        out_shape=jax.ShapeDtypeStruct((Mp, N), out_dtype),
        grid_spec=pltpu.PrefetchScalarGridSpec(
            num_scalar_prefetch=0,
            grid=(Mp // tm, N // tn),
            in_specs=[
                pl.BlockSpec((tm, K), lambda i, j: (i, 0)),
                pl.BlockSpec((K, tn), lambda i, j: (0, j)),
                pl.BlockSpec((1, tn), lambda i, j: (0, j)),
            ],
            out_specs=pl.BlockSpec((tm, tn), lambda i, j: (i, j)),
        ),
        compiler_params=pltpu.CompilerParams(
            dimension_semantics=("parallel", "parallel"),
            vmem_limit_bytes=_VMEM_LIMIT),
        cost_estimate=cost,
    )(_as(x, jnp.bfloat16), _as(w_t, jnp.bfloat16), bias)
    return out[:M] if Mp != M else out


# ----------------------------- LSTM recurrence kernel -------------------------

def _lstm_rec_kernel(gx_ref, whh_ref, h0_ref, c0_ref, out_ref, h_scr, c_scr,
                     *, hidden_dim, t_block, unroll):
    H = hidden_dim

    # grid = (batch blocks, time chunks); re-init carries at the first chunk.
    @pl.when(pl.program_id(1) == 0)
    def _():
        h_scr[...] = jnp.broadcast_to(h0_ref[...], h_scr.shape)   # bf16
        c_scr[...] = jnp.broadcast_to(c0_ref[...], c_scr.shape)   # f32

    # Only the small (rows, H) x (H, 4H) hidden-state matmul is on the
    # sequential path (x @ W_ih^T + bias was hoisted into one big GEMM).
    # fori_loop (not a 32-step Python unroll) bounds vreg live ranges; h is
    # carried in bf16 (feeds the MXU and the output store directly), c in f32.
    def step(tt, carry):
        h_prev, c_prev = carry
        gates = (gx_ref[tt].astype(jnp.float32)
                 + jnp.dot(h_prev, whh_ref[...],
                           preferred_element_type=jnp.float32))
        i_g = jax.nn.sigmoid(gates[:, 0 * H:1 * H])
        f_g = jax.nn.sigmoid(gates[:, 1 * H:2 * H])
        g_g = jnp.tanh(gates[:, 2 * H:3 * H])
        o_g = jax.nn.sigmoid(gates[:, 3 * H:4 * H])
        c_new = f_g * c_prev + i_g * g_g
        h_new = (o_g * jnp.tanh(c_new)).astype(jnp.bfloat16)
        out_ref[tt] = h_new
        return (h_new, c_new)

    h, c = lax.fori_loop(0, t_block, step, (h_scr[...], c_scr[...]),
                         unroll=unroll)
    h_scr[...] = h
    c_scr[...] = c


def lstm_layer(x_tm, lp):
    """One unidirectional LSTM layer, time-major.

    x_tm : (L, bsz, in_dim) time-major bf16 input
    lp   : prepared layer params (pre-transposed bf16 weights, combined bias)
    returns (L, bsz, H) bfloat16 hidden states
    """
    L, bsz, _ = x_tm.shape
    w_hh_t = lp["w_hh_t"]                       # (H, 4H) bf16
    H = w_hh_t.shape[0]

    # (1) hoisted input projection over all L*bsz tokens; bf16 output halves
    #     the largest intermediate's HBM traffic and the recurrence VMEM block.
    gates_x = dense(x_tm.reshape(L * bsz, -1), lp["w_ih_t"], lp["bias"],
                    out_dtype=jnp.bfloat16)                     # (L*bsz, 4H) bf16
    gates_x = gates_x.reshape(L, bsz, 4 * H)

    # (2) sequential recurrence, chunked over time.  Small-VMEM (v7x-like)
    #     chips get a <=16-step chunk.  Single-TC chips never split the batch
    #     (splitting only serializes: MXU passes/step don't shrink below ~128
    #     rows); a 2-TC chip splits only when gate elementwise/EUP work is big.
    t_block = _pick_time_block(L, 16 if _SMALL_VMEM else 32)
    bb = bsz
    if _SMALL_VMEM and bsz >= 64 and (bsz // 2) % 8 == 0:
        bb = bsz // 2
    unroll = True if t_block <= 8 else 8

    kernel = functools.partial(_lstm_rec_kernel, hidden_dim=H,
                               t_block=t_block, unroll=unroll)
    cost = pl.CostEstimate(
        flops=int(2 * L * bsz * H * 4 * H),
        transcendentals=int(5 * L * bsz * H),
        bytes_accessed=int(2 * L * bsz * 4 * H + 2 * L * bsz * H + 2 * H * 4 * H))
    return pl.pallas_call(
        kernel,
        out_shape=jax.ShapeDtypeStruct((L, bsz, H), jnp.bfloat16),
        grid_spec=pltpu.PrefetchScalarGridSpec(
            num_scalar_prefetch=0,
            grid=(bsz // bb, L // t_block),
            in_specs=[
                pl.BlockSpec((t_block, bb, 4 * H), lambda b, s: (s, b, 0)),  # gates_x chunk (bf16)
                _invariant_spec((H, 4 * H), lambda b, s: (0, 0)),            # W_hh^T (bf16, resident)
                _invariant_spec((1, H), lambda b, s: (0, 0)),                # h0 (bf16)
                _invariant_spec((1, H), lambda b, s: (0, 0)),                # c0 (f32)
            ],
            out_specs=pl.BlockSpec((t_block, bb, H), lambda b, s: (s, b, 0)),
            scratch_shapes=[
                pltpu.VMEM((bb, H), jnp.bfloat16),   # h carry (bf16)
                pltpu.VMEM((bb, H), jnp.float32),    # c carry (f32)
            ],
        ),
        compiler_params=pltpu.CompilerParams(
            dimension_semantics=("parallel", "arbitrary"),
            vmem_limit_bytes=_VMEM_LIMIT),
        cost_estimate=cost,
    )(gates_x, w_hh_t, lp["h0"], lp["c0"])


# --------------------------- tiled output projection --------------------------

def _proj_kernel(hs_ref, wout_ref, bout_ref, wlog_ref, blog_ref, logits_ref,
                 e_scr):
    # e = hs @ W_out^T + b_out is computed (and cast to bf16) ONCE per row tile
    # and reused for every vocab tile (vocab axis is the inner grid axis).
    @pl.when(pl.program_id(1) == 0)
    def _():
        e_scr[...] = (jnp.dot(hs_ref[...], wout_ref[...],
                              preferred_element_type=jnp.float32)
                      + bout_ref[...]).astype(e_scr.dtype)
    logits_ref[...] = (jnp.dot(e_scr[...], wlog_ref[...],
                               preferred_element_type=jnp.float32)
                       + blog_ref[...]).astype(logits_ref.dtype)


def project_to_logits(hs_flat, w_out_t, b_out, w_logit_t, b_logit, vocab_size,
                      *, out_dtype=jnp.bfloat16):
    """hs_flat:(N,H) bf16 -> logits:(N,V) out_dtype.
    w_out_t:(H,E) bf16, w_logit_t:(E,Vp) bf16 (tied embedding, vocab padded to
    a multiple of 128), b_out:(1,E) f32, b_logit:(1,Vp) f32."""
    N, H = hs_flat.shape
    E = w_out_t.shape[1]
    Vp = w_logit_t.shape[1]

    Np = _round_up(N, 128)
    if Np != N:
        hs_flat = jnp.pad(hs_flat, ((0, Np - N), (0, 0)))
    # Big row tile => W_logit^T streamed far fewer times (projection was
    # DMA-bound at tn=256).  tv stays 512/256/128 on every generation.
    tn = _pick_tile(Np, (1024, 512, 256, 128))
    tv = _pick_tile(Vp, (512, 256, 128))

    cost = pl.CostEstimate(
        flops=int(2 * Np * (H * E + E * Vp)),
        transcendentals=0,
        bytes_accessed=int(2 * Np * H + 2 * H * E + 2 * E * Vp * (Np // tn)
                           + 2 * Np * Vp))
    out = pl.pallas_call(
        _proj_kernel,
        out_shape=jax.ShapeDtypeStruct((Np, Vp), out_dtype),
        grid_spec=pltpu.PrefetchScalarGridSpec(
            num_scalar_prefetch=0,
            grid=(Np // tn, Vp // tv),
            in_specs=[
                pl.BlockSpec((tn, H), lambda i, j: (i, 0)),     # hidden-state rows
                _invariant_spec((H, E), lambda i, j: (0, 0)),   # W_out^T (resident)
                _invariant_spec((1, E), lambda i, j: (0, 0)),   # b_out
                pl.BlockSpec((E, tv), lambda i, j: (0, j)),     # W_logit^T vocab tile
                pl.BlockSpec((1, tv), lambda i, j: (0, j)),     # b_logit vocab tile
            ],
            out_specs=pl.BlockSpec((tn, tv), lambda i, j: (i, j)),
            scratch_shapes=[pltpu.VMEM((tn, E), jnp.bfloat16)],  # e cache (bf16)
        ),
        compiler_params=pltpu.CompilerParams(
            dimension_semantics=("parallel", "arbitrary"),
            vmem_limit_bytes=_VMEM_LIMIT),
        cost_estimate=cost,
    )(hs_flat, w_out_t, b_out, w_logit_t, b_logit)
    if Np != N or Vp != vocab_size:
        out = out[:N, :vocab_size]
    return out


# --------------------------------- LSTMLM ------------------------------------

def init_params(key, n_layers, embed_dim, hidden_dim, vocab_size):
    ks = jax.random.split(key, 4 + 4 * n_layers)
    p = {}
    p["embed"] = jax.random.normal(ks[0], (vocab_size, embed_dim), jnp.float32) * 0.1
    p["h0"] = jax.random.normal(ks[1], (n_layers, 1, hidden_dim), jnp.float32) / jnp.sqrt(hidden_dim)
    p["c0"] = jax.random.normal(ks[2], (n_layers, 1, hidden_dim), jnp.float32) / jnp.sqrt(hidden_dim)
    scale = 1.0 / jnp.sqrt(hidden_dim)
    p["lstm"] = []
    for l in range(n_layers):
        in_dim = embed_dim if l == 0 else hidden_dim
        kk = jax.random.split(ks[3 + l], 4)
        p["lstm"].append({
            "w_ih": jax.random.uniform(kk[0], (4 * hidden_dim, in_dim), jnp.float32, -scale, scale),
            "w_hh": jax.random.uniform(kk[1], (4 * hidden_dim, hidden_dim), jnp.float32, -scale, scale),
            "b_ih": jax.random.uniform(kk[2], (4 * hidden_dim,), jnp.float32, -scale, scale),
            "b_hh": jax.random.uniform(kk[3], (4 * hidden_dim,), jnp.float32, -scale, scale),
        })
    kw = jax.random.split(ks[3 + n_layers], 3)
    out_scale = 1.0 / jnp.sqrt(hidden_dim)
    p["w_out"] = jax.random.uniform(kw[0], (embed_dim, hidden_dim), jnp.float32, -out_scale, out_scale)
    p["b_out"] = jax.random.uniform(kw[1], (embed_dim,), jnp.float32, -out_scale, out_scale)
    # tie_embeddings=True -> logit.weight is the embedding matrix
    p["b_logit"] = jax.random.uniform(kw[2], (vocab_size,), jnp.float32,
                                      -1.0 / jnp.sqrt(embed_dim), 1.0 / jnp.sqrt(embed_dim))
    return p


def prepare_params(params):
    """One-time layout/dtype prep HOISTED out of the forward path:
    bf16 weights pre-transposed for the kernels (incl. the ~V*E tied-embedding
    transpose), combined LSTM biases, vocab padded to a multiple of 128."""
    V, E = params["embed"].shape
    H = params["h0"].shape[-1]
    Vp = _round_up(V, 128)

    embed_bf16 = _as(params["embed"], jnp.bfloat16)          # (V, E) gather table
    w_logit_t = embed_bf16.T                                 # (E, V) tied weights
    b_logit = _as(params["b_logit"], jnp.float32)
    if Vp != V:
        w_logit_t = jnp.pad(w_logit_t, ((0, 0), (0, Vp - V)))
        b_logit = jnp.pad(b_logit, (0, Vp - V))

    prepared = {
        "embed_bf16": embed_bf16,
        "w_logit_t": w_logit_t,                              # (E, Vp) bf16
        "b_logit": b_logit.reshape(1, Vp),                   # (1, Vp) f32
        "w_out_t": _as(params["w_out"], jnp.bfloat16).T,     # (H, E) bf16
        "b_out": _as(params["b_out"], jnp.float32).reshape(1, E),
        "vocab_size": V,
        "layers": [],
    }
    for l, lw in enumerate(params["lstm"]):
        prepared["layers"].append({
            "w_ih_t": _as(lw["w_ih"], jnp.bfloat16).T,       # (in_dim, 4H) bf16
            "w_hh_t": _as(lw["w_hh"], jnp.bfloat16).T,       # (H, 4H) bf16
            "bias": (lw["b_ih"] + lw["b_hh"]).astype(jnp.float32),
            "h0": _as(params["h0"][l], jnp.bfloat16).reshape(1, H),
            "c0": _as(params["c0"][l], jnp.float32).reshape(1, H),
        })
    return prepared


def lstmlm_forward(prepared, x):
    """x: (bsz, L) int32 token ids -> logits (bsz, L, vocab) in bfloat16."""
    bsz, L = x.shape

    # Embedding lookup from the cached bf16 table, directly in time-major
    # order -> no f32 embedded tensor, no HBM transpose on the way in.
    inp = jnp.take(prepared["embed_bf16"], x.T, axis=0)       # (L, bsz, E) bf16

    for lp in prepared["layers"]:
        inp = lstm_layer(inp, lp)                             # (L, bsz, H) bf16
        # TODO(synk): inter-layer dropout is a no-op in eval mode (dropout=0.0)

    # Only remaining layout fix-up: small bf16 hidden-state transpose so the
    # logits come out batch-major with no post-transpose of the big (N,V) array.
    hs_flat = jnp.transpose(inp, (1, 0, 2)).reshape(bsz * L, -1)   # (bsz*L, H) bf16

    logits_flat = project_to_logits(hs_flat, prepared["w_out_t"], prepared["b_out"],
                                    prepared["w_logit_t"], prepared["b_logit"],
                                    prepared["vocab_size"],
                                    out_dtype=jnp.bfloat16)
    return logits_flat.reshape(bsz, L, -1)


# ------------------------------ pure-JAX reference ---------------------------

def lstmlm_reference(params, x):
    bsz, L = x.shape
    n_layers = params["h0"].shape[0]
    H = params["h0"].shape[-1]
    hp = jax.lax.Precision.HIGHEST
    inp = jnp.transpose(jnp.take(params["embed"], x, axis=0), (1, 0, 2))
    for l in range(n_layers):
        lw = params["lstm"][l]
        h = jnp.broadcast_to(params["h0"][l], (bsz, H))
        c = jnp.broadcast_to(params["c0"][l], (bsz, H))
        outs = []
        for t in range(L):
            g = (jnp.dot(inp[t], lw["w_ih"].T, precision=hp)
                 + jnp.dot(h, lw["w_hh"].T, precision=hp)
                 + lw["b_ih"] + lw["b_hh"])
            i_g = jax.nn.sigmoid(g[:, 0 * H:1 * H])
            f_g = jax.nn.sigmoid(g[:, 1 * H:2 * H])
            g_g = jnp.tanh(g[:, 2 * H:3 * H])
            o_g = jax.nn.sigmoid(g[:, 3 * H:4 * H])
            c = f_g * c + i_g * g_g
            h = o_g * jnp.tanh(c)
            outs.append(h)
        inp = jnp.stack(outs, axis=0)
    hs = jnp.transpose(inp, (1, 0, 2)).reshape(bsz * L, H)
    e = jnp.dot(hs, params["w_out"].T, precision=hp) + params["b_out"]
    logits = jnp.dot(e, params["embed"].T, precision=hp) + params["b_logit"]
    return logits.reshape(bsz, L, -1)


if __name__ == "__main__":
    n_layers, embed_dim, hidden_dim, vocab_size = 2, 32, 32, 64
    bsz, L = 2, 8

    key = jax.random.PRNGKey(0)
    pkey, xkey = jax.random.split(key)
    params = init_params(pkey, n_layers, embed_dim, hidden_dim, vocab_size)
    x = jax.random.randint(xkey, (bsz, L), 0, vocab_size, dtype=jnp.int32)

    prepared = jax.block_until_ready(prepare_params(params))   # one-time prep
    logits = jax.block_until_ready(lstmlm_forward(prepared, x))
    ref = jax.block_until_ready(lstmlm_reference(params, x))

    assert logits.shape == (bsz, L, vocab_size)
    # bf16 weights/activations/logits (f32 accumulation) in the kernels ->
    # loosened tolerance vs. the full-f32 reference (expected precision change).
    logits_f32 = logits.astype(jnp.float32)
    max_err = float(jnp.max(jnp.abs(logits_f32 - ref)))
    assert jnp.allclose(logits_f32, ref, rtol=3e-2, atol=3e-2), max_err
    print("KERNEL_OK")
</pallas_src>

<mosaic_0001>
module attributes {stable_mosaic.version = 11 : i64} {
  func.func @_dense_kernel(%arg0: i32, %arg1: i32, %arg2: memref<128x32xbf16, #tpu.memory_space<vmem>>, %arg3: memref<32x128xbf16, #tpu.memory_space<vmem>>, %arg4: memref<1x128xf32, #tpu.memory_space<vmem>>, %arg5: memref<128x128xbf16, #tpu.memory_space<vmem>>) attributes {dimension_semantics = [#tpu.dimension_semantics<parallel>, #tpu.dimension_semantics<parallel>], iteration_bounds = array<i64: 1, 1>, scalar_prefetch = 0 : i64, scratch_operands = 0 : i64, tpu.core_type = #tpu.core_type<tc>, window_params = [{transform_indices = @transform_0, window_bounds = array<i64: 128, 32>}, {transform_indices = @transform_1, window_bounds = array<i64: 32, 128>}, {transform_indices = @transform_2, window_bounds = array<i64: 1, 128>}, {transform_indices = @transform_3, window_bounds = array<i64: 128, 128>}]} {
    %c0 = arith.constant 0 : index
    %c0_0 = arith.constant 0 : index
    %0 = vector.load %arg2[%c0, %c0_0] : memref<128x32xbf16, #tpu.memory_space<vmem>>, vector<128x32xbf16>
    %c0_1 = arith.constant 0 : index
    %c0_2 = arith.constant 0 : index
    %1 = vector.load %arg3[%c0_1, %c0_2] : memref<32x128xbf16, #tpu.memory_space<vmem>>, vector<32x128xbf16>
    %cst = arith.constant dense<0.000000e+00> : vector<128x128xf32>
    %2 = tpu.matmul %0, %1, %cst {dimension_numbers = #tpu.dot_dimension_numbers<[1], [0], [0], [1], [0, 0, 1, 1], [], []>} : vector<128x32xbf16>, vector<32x128xbf16>, vector<128x128xf32> -> vector<128x128xf32>
    %c0_3 = arith.constant 0 : index
    %c0_4 = arith.constant 0 : index
    %3 = vector.load %arg4[%c0_3, %c0_4] : memref<1x128xf32, #tpu.memory_space<vmem>>, vector<1x128xf32>
    %4 = vector.broadcast %3 : vector<1x128xf32> to vector<128x128xf32>
    %5 = arith.addf %2, %4 : vector<128x128xf32>
    %6 = arith.truncf %5 : vector<128x128xf32> to vector<128x128xbf16>
    %c0_5 = arith.constant 0 : index
    %c0_6 = arith.constant 0 : index
    %7 = vector.load %arg5[%c0_5, %c0_6] : memref<128x128xbf16, #tpu.memory_space<vmem>>, vector<128x128xbf16>
    tpu.vector_store %arg5[%c0_5, %c0_6], %6 {strides = array<i32>} : memref<128x128xbf16, #tpu.memory_space<vmem>>, vector<128x128xbf16>,
    return
  }
  func.func @transform_0(%arg0: i32, %arg1: i32) -> (i32, i32) {
    %c0_i32 = arith.constant 0 : i32
    %c0_i32_0 = arith.constant 0 : i32
    return %arg0, %c0_i32 : i32, i32
  }
  func.func @transform_1(%arg0: i32, %arg1: i32) -> (i32, i32) {
    %c0_i32 = arith.constant 0 : i32
    %c0_i32_0 = arith.constant 0 : i32
    return %c0_i32, %arg1 : i32, i32
  }
  func.func @transform_2(%arg0: i32, %arg1: i32) -> (i32, i32) {
    %c0_i32 = arith.constant 0 : i32
    %c0_i32_0 = arith.constant 0 : i32
    return %c0_i32, %arg1 : i32, i32
  }
  func.func @transform_3(%arg0: i32, %arg1: i32) -> (i32, i32) {
    %c0_i32 = arith.constant 0 : i32
    return %arg0, %arg1 : i32, i32
  }
}

</mosaic_0001>

<llo_original>
// kernel: tpu_custom_call.1
$region0: #{tpu_custom_call.1}
  #allocation0 [shape = 'u32[]', space=smem, size = 0x4, offset = 0x4, fixed_abs, tag = 'smem constant byte address 0x4 - core index']
  #allocation1 [shape = 'u32[144,128]{1,0:T(1,128)}', space=vmem, size = 0x12000, scoped, tag = 'internal scratch']
  %s0 = inlined_call_operand.vmem [shape: bf16[128,32], index: 0, kind: input, shape index: {}]
  %s1 = inlined_call_operand.vmem [shape: bf16[32,128], index: 1, kind: input, shape index: {}]
  %s2 = inlined_call_operand.vmem [shape: f32[1,128], index: 2, kind: input, shape index: {}]
  %s3 = inlined_call_operand.hbm [shape: bf16[128,128], index: 3, kind: output, shape index: {}]
  %s4 = sld [smem:[#allocation0]]
  $region22: #{tpu_custom_call.1} parent=0
    _
  %s6 = ssub.s32 1, %s4
  %s7 = scalar_select 0, %s6, %s4
  $region1: #{tpu_custom_call.1} parent=0
    #allocation2 [shape = 'u8[32768]{0}', space=vmem, size = 0x8000, scoped, tag = 'output window, operand 0, single buffered']
    #allocation3 [shape = 's32[1]{0}', space=sflag, size = 0x4, scoped, tag = 'scoped memory for tpu_custom_call.1']
    %8 = vsyncpa [#allocation3], 0
    // Predicated region
    $region2: #{tpu_custom_call.1} parent=1 // pred_check
      _
    $region3: #{tpu_custom_call.1} parent=1 // pred_check_branch
      %10 = sbr.rel (0) target = $region5
    $region4: #{tpu_custom_call.1} parent=1 // pred_region
      _
    $region5: #{tpu_custom_call.1} parent=1 // pred_fallthru
      _
    // Predicated region
    $region6: #{tpu_custom_call.1} parent=1 // pred_check
      _
    $region7: #{tpu_custom_call.1} parent=1 // pred_check_branch
      %12 = sbr.rel (0) target = $region9
    $region8: #{tpu_custom_call.1} parent=1 // pred_region
      _
    $region9: #{tpu_custom_call.1} parent=1 // pred_fallthru
      _
    // Predicated region
    $region10: #{tpu_custom_call.1} parent=1 // pred_check
      _
    $region11: #{tpu_custom_call.1} parent=1 // pred_check_branch
      %14 = sbr.rel (0) target = $region13
    $region12: #{tpu_custom_call.1} parent=1 // pred_region
      _
    $region13: #{tpu_custom_call.1} parent=1 // pred_fallthru
      _
    %v16 = vld [vmem:[%s0] sm:$0xf]
    %v17 = vld [vmem:[%s0 + $0x4] sm:$0xf]
    %v18 = vld [vmem:[%s0 + $0x8] sm:$0xf]
    %v19 = vld [vmem:[%s0 + $0xc] sm:$0xf]
    %v20 = vld [vmem:[%s0 + $0x10] sm:$0xf]
    %v21 = vld [vmem:[%s0 + $0x14] sm:$0xf]
    %v22 = vld [vmem:[%s0 + $0x18] sm:$0xf]
    %v23 = vld [vmem:[%s0 + $0x1c] sm:$0xf]
    %v24 = vld [vmem:[%s0 + $0x20] sm:$0xf]
    %v25 = vld [vmem:[%s0 + $0x24] sm:$0xf]
    %v26 = vld [vmem:[%s0 + $0x28] sm:$0xf]
    %v27 = vld [vmem:[%s0 + $0x2c] sm:$0xf]
    %v28 = vld [vmem:[%s0 + $0x30] sm:$0xf]
    %v29 = vld [vmem:[%s0 + $0x34] sm:$0xf]
    %v30 = vld [vmem:[%s0 + $0x38] sm:$0xf]
    %v31 = vld [vmem:[%s0 + $0x3c] sm:$0xf]
    %v32 = vld [vmem:[%s1] sm:$0xf]
    %v33 = vld [vmem:[%s1 + $0x4] sm:$0xf]
    %v34 = vld [vmem:[%s1 + $0x8] sm:$0xf]
    %v35 = vld [vmem:[%s1 + $0xc] sm:$0xf]
    %v36 = vld [vmem:[%s2] sm:$0x1]
    %v38 = vlaneseq
    %v39 = vshrl.u32 %v38, 7
    %v40 = vsub.s32 0, %v39
    %v41 = vrot.slane %v36, %v40
    %v59 = vunpack.c.l.b16 %v16
    %v60 = vunpack.c.l.b16 %v17
    %v61 = vunpack.c.l.b16 %v18
    %v62 = vunpack.c.l.b16 %v19
    %v63 = vunpack.c.l.b16 %v20
    %v64 = vunpack.c.l.b16 %v21
    %v65 = vunpack.c.l.b16 %v22
    %v66 = vunpack.c.l.b16 %v23
    %v67 = vunpack.c.l.b16 %v24
    %v68 = vunpack.c.l.b16 %v25
    %v69 = vunpack.c.l.b16 %v26
    %v70 = vunpack.c.l.b16 %v27
    %v71 = vunpack.c.l.b16 %v28
    %v72 = vunpack.c.l.b16 %v29
    %v73 = vunpack.c.l.b16 %v30
    %v74 = vunpack.c.l.b16 %v31
    %v75 = vpack.c.b16 %v60, %v59
    %v76 = vpack.c.b16 %v62, %v61
    %v77 = vpack.c.b16 %v64, %v63
    %v78 = vpack.c.b16 %v66, %v65
    %v79 = vpack.c.b16 %v68, %v67
    %v80 = vpack.c.b16 %v70, %v69
    %v81 = vpack.c.b16 %v72, %v71
    %v82 = vpack.c.b16 %v74, %v73
    %v87 = vunpack.c.l.b16 %v32
    %v88 = vunpack.c.l.b16 %v33
    %v89 = vunpack.c.l.b16 %v34
    %v90 = vunpack.c.l.b16 %v35
    %v91 = vpack.c.b16 %v88, %v87
    %v92 = vpack.c.b16 %v90, %v89
    %vm95 = vcmask 261120
    %v97 = vsel %vm95, %v75, 0
    %v100 = vsel %vm95, %v76, 0
    %v103 = vsel %vm95, %v77, 0
    %v106 = vsel %vm95, %v78, 0
    %v109 = vsel %vm95, %v79, 0
    %v112 = vsel %vm95, %v80, 0
    %v115 = vsel %vm95, %v81, 0
    %v118 = vsel %vm95, %v82, 0
    %120 = vmatprep.subr.bf16.mxu0 0
    %121 = vmatpush1.bf16.msra.mxu0 0
    %122 = vmatprep.subr.bf16.mxu0 0
    %123 = vmatpush1.bf16.msra.mxu0 0
    %124 = vmatprep.subr.bf16.mxu0 0
    %125 = vmatpush1.bf16.msra.mxu0 0
    %126 = vmatprep.subr.bf16.mxu0 0
    %127 = vmatpush1.bf16.msra.mxu0 0
    %128 = vmatprep.subr.bf16.mxu0 0
    %129 = vmatpush1.bf16.msra.mxu0 0
    %130 = vmatprep.subr.bf16.mxu0 0
    %131 = vmatpush1.bf16.msra.mxu0 0
    %132 = vmatprep.subr.bf16.mxu0 0
    %133 = vmatpush1.bf16.msra.mxu0 %v92
    %134 = vmatprep.subr.bf16.mxu0 0
    %135 = vmatpush1.bf16.msra.mxu0 %v91
    %136 = vmatprep.subr.bf16.mxu0 0
    %137 = vmatpush2.bf16.msra.mxu0 0
    %138 = vmatprep.subr.bf16.mxu0 0
    %139 = vmatpush2.bf16.msra.mxu0 0
    %140 = vmatprep.subr.bf16.mxu0 0
    %141 = vmatpush2.bf16.msra.mxu0 0
    %142 = vmatprep.subr.bf16.mxu0 0
    %143 = vmatpush2.bf16.msra.mxu0 0
    %144 = vmatprep.subr.bf16.mxu0 0
    %145 = vmatpush2.bf16.msra.mxu0 0
    %146 = vmatprep.subr.bf16.mxu0 0
    %147 = vmatpush2.bf16.msra.mxu0 0
    %148 = vmatprep.subr.bf16.mxu0 0
    %149 = vmatpush2.bf16.msra.mxu0 0
    %150 = vmatprep.subr.bf16.mxu0 0
    %151 = vmatpush2.bf16.msra.mxu0 0
    %152 = vmatprep.mubr.bf16.mxu0 0
    %153 = vmatmul.mubr.bf16.gmra.mxu0 %v97
    %v154 = vpop.f32.mrf.mxu0
    %v155 = vadd.f32 %v41, %v154
    %v156 = vpop.f32.mrf.mxu0
    %v157 = vpop.f32.mrf.mxu0
    %v158 = vadd.f32 %v41, %v157
    %v159 = vpop.f32.mrf.mxu0
    %160 = vmatprep.mubr.bf16.mxu0 0
    %161 = vmatmul.mubr.bf16.gmra.mxu0 %v100
    %v162 = vpop.f32.mrf.mxu0
    %v163 = vadd.f32 %v41, %v162
    %v164 = vpop.f32.mrf.mxu0
    %v165 = vpop.f32.mrf.mxu0
    %v166 = vadd.f32 %v41, %v165
    %v167 = vpop.f32.mrf.mxu0
    %168 = vmatprep.mubr.bf16.mxu0 0
    %169 = vmatmul.mubr.bf16.gmra.mxu0 %v103
    %v170 = vpop.f32.mrf.mxu0
    %v171 = vadd.f32 %v41, %v170
    %v172 = vpop.f32.mrf.mxu0
    %v173 = vpop.f32.mrf.mxu0
    %v174 = vadd.f32 %v41, %v173
    %v175 = vpop.f32.mrf.mxu0
    %176 = vmatprep.mubr.bf16.mxu0 0
    %177 = vmatmul.mubr.bf16.gmra.mxu0 %v106
    %v178 = vpop.f32.mrf.mxu0
    %v179 = vadd.f32 %v41, %v178
    %v180 = vpop.f32.mrf.mxu0
    %v181 = vpop.f32.mrf.mxu0
    %v182 = vadd.f32 %v41, %v181
    %v183 = vpop.f32.mrf.mxu0
    %184 = vmatprep.mubr.bf16.mxu0 0
    %185 = vmatmul.mubr.bf16.gmra.mxu0 %v109
    %v186 = vpop.f32.mrf.mxu0
    %v187 = vadd.f32 %v41, %v186
    %v188 = vpop.f32.mrf.mxu0
    %v189 = vpop.f32.mrf.mxu0
    %v190 = vadd.f32 %v41, %v189
    %v191 = vpop.f32.mrf.mxu0
    %192 = vmatprep.mubr.bf16.mxu0 0
    %193 = vmatmul.mubr.bf16.gmra.mxu0 %v112
    %v194 = vpop.f32.mrf.mxu0
    %v195 = vadd.f32 %v41, %v194
    %v196 = vpop.f32.mrf.mxu0
    %v197 = vpop.f32.mrf.mxu0
    %v198 = vadd.f32 %v41, %v197
    %v199 = vpop.f32.mrf.mxu0
    %200 = vmatprep.mubr.bf16.mxu0 0
    %201 = vmatmul.mubr.bf16.gmra.mxu0 %v115
    %v202 = vpop.f32.mrf.mxu0
    %v203 = vadd.f32 %v41, %v202
    %v204 = vpop.f32.mrf.mxu0
    %v205 = vpop.f32.mrf.mxu0
    %v206 = vadd.f32 %v41, %v205
    %v207 = vpop.f32.mrf.mxu0
    %208 = vmatprep.mubr.bf16.mxu0 0
    %209 = vmatmul.mubr.bf16.gmra.mxu0 %v118
    %v210 = vpop.f32.mrf.mxu0
    %v211 = vadd.f32 %v41, %v210
    %v212 = vpop.f32.mrf.mxu0
    %v213 = vpop.f32.mrf.mxu0
    %v214 = vadd.f32 %v41, %v213
    %v215 = vpop.f32.mrf.mxu0
    %216 = vdwg.mxu0
    %v217 = vpack.c.bf16 %v158, %v155
    %v218 = vpack.c.bf16 %v166, %v163
    %v219 = vpack.c.bf16 %v174, %v171
    %v220 = vpack.c.bf16 %v182, %v179
    %v221 = vpack.c.bf16 %v190, %v187
    %v222 = vpack.c.bf16 %v198, %v195
    %v223 = vpack.c.bf16 %v206, %v203
    %v224 = vpack.c.bf16 %v214, %v211
    %v233 = vunpack.c.l.b16 %v217
    %v234 = vunpack.c.h.b16 %v217
    %v235 = vunpack.c.l.b16 %v218
    %v236 = vunpack.c.h.b16 %v218
    %v237 = vunpack.c.l.b16 %v219
    %v238 = vunpack.c.h.b16 %v219
    %v239 = vunpack.c.l.b16 %v220
    %v240 = vunpack.c.h.b16 %v220
    %v241 = vunpack.c.l.b16 %v221
    %v242 = vunpack.c.h.b16 %v221
    %v243 = vunpack.c.l.b16 %v222
    %v244 = vunpack.c.h.b16 %v222
    %v245 = vunpack.c.l.b16 %v223
    %v246 = vunpack.c.h.b16 %v223
    %v247 = vunpack.c.l.b16 %v224
    %v248 = vunpack.c.h.b16 %v224
    %v249 = vpack.c.b16 %v233, %v233
    %v250 = vpack.c.b16 %v234, %v234
    %v251 = vpack.c.b16 %v235, %v235
    %v252 = vpack.c.b16 %v236, %v236
    %v253 = vpack.c.b16 %v237, %v237
    %v254 = vpack.c.b16 %v238, %v238
    %v255 = vpack.c.b16 %v239, %v239
    %v256 = vpack.c.b16 %v240, %v240
    %v257 = vpack.c.b16 %v241, %v241
    %v258 = vpack.c.b16 %v242, %v242
    %v259 = vpack.c.b16 %v243, %v243
    %v260 = vpack.c.b16 %v244, %v244
    %v261 = vpack.c.b16 %v245, %v245
    %v262 = vpack.c.b16 %v246, %v246
    %v263 = vpack.c.b16 %v247, %v247
    %v264 = vpack.c.b16 %v248, %v248
    %281 = vst [vmem:[#allocation2] sm:$0xf] %v249
    %282 = vst [vmem:[#allocation2 + $0x4] sm:$0xf] %v250
    %283 = vst [vmem:[#allocation2 + $0x8] sm:$0xf] %v251
    %284 = vst [vmem:[#allocation2 + $0xc] sm:$0xf] %v252
    %285 = vst [vmem:[#allocation2 + $0x10] sm:$0xf] %v253
    %286 = vst [vmem:[#allocation2 + $0x14] sm:$0xf] %v254
    %287 = vst [vmem:[#allocation2 + $0x18] sm:$0xf] %v255
    %288 = vst [vmem:[#allocation2 + $0x1c] sm:$0xf] %v256
    %289 = vst [vmem:[#allocation2 + $0x20] sm:$0xf] %v257
    %290 = vst [vmem:[#allocation2 + $0x24] sm:$0xf] %v258
    %291 = vst [vmem:[#allocation2 + $0x28] sm:$0xf] %v259
    %292 = vst [vmem:[#allocation2 + $0x2c] sm:$0xf] %v260
    %293 = vst [vmem:[#allocation2 + $0x30] sm:$0xf] %v261
    %294 = vst [vmem:[#allocation2 + $0x34] sm:$0xf] %v262
    %295 = vst [vmem:[#allocation2 + $0x38] sm:$0xf] %v263
    %296 = vst [vmem:[#allocation2 + $0x3c] sm:$0xf] %v264
    // Predicated region
    $region14: #{tpu_custom_call.1} parent=1 // pred_check
      _
    $region15: #{tpu_custom_call.1} parent=1 // pred_check_branch
      %298 = sbr.rel (0) target = $region17
    $region16: #{tpu_custom_call.1} parent=1 // pred_region
      %s300 = ssub.s32 1024, 1024
      %301 = vsyncadd [#allocation3], %s300
      %s302 = sshll.u32 [#allocation2], 4
      %s303 = int_to_ptr.vmem [resolvable:$true] %s302
      %308 = dma.vmem_to_hbm [thread:$0]  %s303, 1024, %s3, [#allocation3], 64, 64, 4
    $region17: #{tpu_custom_call.1} parent=1 // pred_fallthru
      _
    // Predicated region
    $region18: #{tpu_custom_call.1} parent=1 // pred_check
      _
    $region19: #{tpu_custom_call.1} parent=1 // pred_check_branch
      %310 = sbr.rel (0) target = $region21
    $region20: #{tpu_custom_call.1} parent=1 // pred_region
      %311 = dma.done [#allocation3], 1024
    $region21: #{tpu_custom_call.1} parent=1 // pred_fallthru
      _
    %312 = vsyncpa [#allocation3], 1

</llo_original>
